<compile_context>
chip_gen: v7x
topology: tpu7x:2x2x1
jax: 0.10.0
libtpu: 0.0.40
codegen_flags: <defaults>
</compile_context>

<pallas_src>
import math

import jax
import jax.numpy as jnp
from jax import lax
from jax.experimental import pallas as pl
from jax.experimental.pallas import tpu as pltpu

# logit_scale = exp(log(1/0.07)) = 1/0.07  (nn.Parameter(...).exp() in __init__)
LOGIT_SCALE = math.exp(math.log(1.0 / 0.07))
_EPS = 1e-12


def _round_up(x, m):
    return ((x + m - 1) // m) * m


def lseg_head_kernel(x_ref, w_ref, b_ref, t_ref, o_ref):
    """Fused head1 (1x1 conv) + image L2-norm + pixel-text similarity matmul.

    Channel-major, pixel-lane-dense layout:
      x_ref: (1, F, TP)   pixel tile of path_1 features (F = `features`)
      w_ref: (C, F)       head1 1x1-conv weight, torch layout (out_c, features)
      b_ref: (C, 1)       head1 bias (column)
      t_ref: (1, K, C)    this image's text embeddings, pre-normalized and
                          pre-scaled by logit_scale
      o_ref: (1, K, TP)   output logits for this pixel tile (lane-dense)
    """
    x = x_ref[0]                                                    # (F, TP)

    # head1: nn.Conv2d(features, out_c, kernel_size=1)  ==  W @ x + b
    img = jnp.dot(w_ref[...], x, preferred_element_type=jnp.float32) + b_ref[...]

    # image_feature / image_feature.norm(dim=-1, keepdim=True)   (channels = axis 0)
    inv_norm = lax.rsqrt(jnp.sum(img * img, axis=0, keepdims=True) + _EPS)  # (1, TP)
    img_n = img * inv_norm                                           # (C, TP)

    # logit_scale * text_n @ image_n   (scale already folded into t_ref)
    o_ref[0] = jnp.dot(t_ref[0], img_n, preferred_element_type=jnp.float32)  # (K, TP)


def lseg_pixel_text_logits(path1, w1, b1, text_feats_scaled, *, tile_p=1024):
    """path1: (B, F, H, W) NCHW features; w1: (C, F) [torch conv layout];
    b1: (C,); text_feats_scaled: (B, K, C) pre-normalized * logit_scale.
    Returns logits as (B, K, H, W)."""
    B, F, H, W = path1.shape
    C, Fw = w1.shape
    assert Fw == F
    K = text_feats_scaled.shape[1]
    P = H * W

    # Channel-major pixel layout is just a reshape of NCHW (no transpose).
    x_pix = path1.reshape(B, F, P)

    # Lane-aligned tile, pad P so the grid divides evenly (no hard assert).
    tp = min(tile_p, _round_up(P, 128))
    tp = _round_up(tp, 128)
    P_pad = _round_up(P, tp)
    if P_pad != P:
        x_pix = jnp.pad(x_pix, ((0, 0), (0, 0), (0, P_pad - P)))

    b_col = b1.reshape(C, 1)

    out = pl.pallas_call(
        lseg_head_kernel,
        out_shape=jax.ShapeDtypeStruct((B, K, P_pad), jnp.float32),
        grid_spec=pltpu.PrefetchScalarGridSpec(
            num_scalar_prefetch=0,
            grid=(B, P_pad // tp),
            in_specs=[
                pl.BlockSpec((1, F, tp), lambda b, p: (b, 0, p)),
                pl.BlockSpec((C, F), lambda b, p: (0, 0)),   # resident weight
                pl.BlockSpec((C, 1), lambda b, p: (0, 0)),   # resident bias
                pl.BlockSpec((1, K, C), lambda b, p: (b, 0, 0)),
            ],
            out_specs=pl.BlockSpec((1, K, tp), lambda b, p: (b, 0, p)),
        ),
        compiler_params=pltpu.CompilerParams(
            dimension_semantics=("parallel", "parallel"),
            vmem_limit_bytes=64 << 20),
    )(x_pix, w1, b_col, text_feats_scaled)

    if P_pad != P:
        out = out[:, :, :P]
    # Output is already channel-major: (B, K, H*W) -> (B, K, H, W); no transpose.
    return out.reshape(B, K, H, W)


def upsample2x_bilinear_align_corners(x):
    """scratch.output_conv / auxlayer: Interpolate(scale_factor=2, bilinear,
    align_corners=True).  x: (B, C, H, W) -> (B, C, 2H, 2W)."""
    B, C, H, W = x.shape
    OH, OW = 2 * H, 2 * W

    def coords(out_size, in_size):
        src = jnp.arange(out_size, dtype=jnp.float32) * (in_size - 1) / (out_size - 1)
        lo = jnp.floor(src).astype(jnp.int32)
        hi = jnp.minimum(lo + 1, in_size - 1)
        return src - lo.astype(jnp.float32), lo, hi

    fy, y0, y1 = coords(OH, H)
    fx, x0, x1 = coords(OW, W)
    rows = (x[:, :, y0, :] * (1.0 - fy)[None, None, :, None]
            + x[:, :, y1, :] * fy[None, None, :, None])
    out = (rows[:, :, :, x0] * (1.0 - fx)[None, None, None, :]
           + rows[:, :, :, x1] * fx[None, None, None, :])
    return out


def lseg_forward(path1, params, class_info):
    """Eval-mode LSeg forward (post-backbone).  Returns (out, proxy_loss, proto_loss)."""
    tf = params["text_features"][jnp.asarray(class_info)]            # (B, K, out_c)
    # text_feature / text_feature.norm(dim=-1, keepdim=True), done once per image
    # (was recomputed per pixel tile before); logit_scale folded in here.
    tf = tf.astype(jnp.float32)
    t_n = LOGIT_SCALE * tf * lax.rsqrt(
        jnp.sum(tf * tf, axis=-1, keepdims=True) + _EPS)

    logits = lseg_pixel_text_logits(path1, params["head1_w"], params["head1_b"], t_n)
    out = upsample2x_bilinear_align_corners(logits)
    proxy_loss = 0.0   # training-only (use_proxy) branch
    proto_loss = 0.0   # training-only (use_proto) branch
    return out, proxy_loss * 0.01, proto_loss


def reference_forward(path1, params, class_info):
    """Pure-JAX reference for correctness checking (mirrors the PyTorch math)."""
    w1, b1 = params["head1_w"], params["head1_b"]                     # (C, F), (C,)
    tf = params["text_features"][jnp.asarray(class_info)]
    img = jnp.einsum("bfhw,cf->bhwc", path1, w1) + b1
    img_n = img / jnp.linalg.norm(img, axis=-1, keepdims=True)
    t_n = tf / jnp.linalg.norm(tf, axis=-1, keepdims=True)
    logits = LOGIT_SCALE * jnp.einsum("bhwc,bkc->bkhw", img_n, t_n)
    return upsample2x_bilinear_align_corners(logits)


def init_params(key, *, features, out_c, n_labels, n_proxy=5, n_text=2):
    k1, k2, k3, k4 = jax.random.split(key, 4)
    # nn.Conv2d(features, out_c, 1): weight (out_c, features, 1, 1) -> stored (C, F)
    fan_in = features
    bound = 1.0 / math.sqrt(fan_in)
    head1_w = jax.random.uniform(k1, (out_c, features), jnp.float32, -bound, bound)
    head1_b = jax.random.uniform(k2, (out_c,), jnp.float32, -bound, bound)
    # self.proxy = nn.Parameter(torch.rand((n_proxy, out_c)))  (unused in eval)
    proxy = jax.random.uniform(k3, (n_proxy, out_c), jnp.float32)
    # stand-in for clip_pretrained.encode_text outputs, one (2, out_c) per label
    text_features = jax.random.normal(k4, (n_labels, n_text, out_c), jnp.float32)
    return {"head1_w": head1_w, "head1_b": head1_b, "proxy": proxy,
            "text_features": text_features}


if __name__ == "__main__":
    # Small shapes: batch=2, features=32, out_c=128, spatial 16x16, 2 text classes.
    B, F, H, W = 2, 32, 16, 16
    OUT_C = 128
    N_LABELS = 4

    key = jax.random.PRNGKey(0)
    k_x, k_p = jax.random.split(key)
    params = init_params(k_p, features=F, out_c=OUT_C, n_labels=N_LABELS)

    # Synthetic path_1 features (output of refinenet1 in the real model).
    x = jax.random.normal(k_x, (B, F, H, W), jnp.float32)
    class_info = [1, 3]  # per-image class index into self.texts

    out, proxy_loss, proto_loss = lseg_forward(x, params, class_info)
    out = jax.block_until_ready(out)

    ref = jax.block_until_ready(reference_forward(x, params, class_info))
    assert out.shape == (B, 2, 2 * H, 2 * W), out.shape
    assert jnp.allclose(out, ref, atol=1e-3, rtol=1e-3), float(jnp.max(jnp.abs(out - ref)))

    print("KERNEL_OK")
</pallas_src>

<mosaic_0001>
module attributes {stable_mosaic.version = 11 : i64} {
  func.func @lseg_head_kernel(%arg0: i32, %arg1: i32, %arg2: memref<1x32x256xf32, #tpu.memory_space<vmem>>, %arg3: memref<128x32xf32, #tpu.memory_space<vmem>>, %arg4: memref<128x1xf32, #tpu.memory_space<vmem>>, %arg5: memref<1x2x128xf32, #tpu.memory_space<vmem>>, %arg6: memref<1x2x256xf32, #tpu.memory_space<vmem>>) attributes {dimension_semantics = [#tpu.dimension_semantics<parallel>, #tpu.dimension_semantics<parallel>], iteration_bounds = array<i64: 2, 1>, scalar_prefetch = 0 : i64, scratch_operands = 0 : i64, tpu.core_type = #tpu.core_type<tc>, window_params = [{transform_indices = @transform_0, window_bounds = array<i64: 1, 32, 256>}, {pipeline_mode = #tpu.pipeline_mode<synchronous>, transform_indices = @transform_1, window_bounds = array<i64: 128, 32>}, {pipeline_mode = #tpu.pipeline_mode<synchronous>, transform_indices = @transform_2, window_bounds = array<i64: 128, 1>}, {transform_indices = @transform_3, window_bounds = array<i64: 1, 2, 128>}, {transform_indices = @transform_4, window_bounds = array<i64: 1, 2, 256>}]} {
    %c0 = arith.constant 0 : index
    %c0_0 = arith.constant 0 : index
    %c0_1 = arith.constant 0 : index
    %0 = vector.load %arg2[%c0, %c0_0, %c0_1] : memref<1x32x256xf32, #tpu.memory_space<vmem>>, vector<1x32x256xf32>
    %1 = vector.shape_cast %0 : vector<1x32x256xf32> to vector<32x256xf32>
    %c0_2 = arith.constant 0 : index
    %c0_3 = arith.constant 0 : index
    %2 = vector.load %arg3[%c0_2, %c0_3] : memref<128x32xf32, #tpu.memory_space<vmem>>, vector<128x32xf32>
    %cst = arith.constant dense<0.000000e+00> : vector<128x256xf32>
    %3 = tpu.matmul %2, %1, %cst {dimension_numbers = #tpu.dot_dimension_numbers<[1], [0], [0], [1], [0, 0, 1, 1], [], []>} : vector<128x32xf32>, vector<32x256xf32>, vector<128x256xf32> -> vector<128x256xf32>
    %c0_4 = arith.constant 0 : index
    %c0_5 = arith.constant 0 : index
    %4 = vector.load %arg4[%c0_4, %c0_5] : memref<128x1xf32, #tpu.memory_space<vmem>>, vector<128x1xf32>
    %5 = vector.broadcast %4 : vector<128x1xf32> to vector<128x256xf32>
    %6 = arith.addf %3, %5 : vector<128x256xf32>
    %7 = arith.mulf %6, %6 : vector<128x256xf32>
    %cst_6 = arith.constant dense<0.000000e+00> : vector<256xf32>
    %8 = vector.multi_reduction <add>, %7, %cst_6 [0] : vector<128x256xf32> to vector<256xf32>
    %9 = vector.shape_cast %8 : vector<256xf32> to vector<1x256xf32>
    %cst_7 = arith.constant 9.99999996E-13 : f32
    %10 = vector.broadcast %cst_7 : f32 to vector<1x256xf32>
    %11 = arith.addf %9, %10 : vector<1x256xf32>
    %12 = math.rsqrt %11 : vector<1x256xf32>
    %13 = vector.broadcast %12 : vector<1x256xf32> to vector<128x256xf32>
    %14 = arith.mulf %6, %13 : vector<128x256xf32>
    %c0_8 = arith.constant 0 : index
    %c0_9 = arith.constant 0 : index
    %c0_10 = arith.constant 0 : index
    %15 = vector.load %arg5[%c0_8, %c0_9, %c0_10] : memref<1x2x128xf32, #tpu.memory_space<vmem>>, vector<1x2x128xf32>
    %16 = vector.shape_cast %15 : vector<1x2x128xf32> to vector<2x128xf32>
    %cst_11 = arith.constant dense<0.000000e+00> : vector<2x256xf32>
    %17 = tpu.matmul %16, %14, %cst_11 {dimension_numbers = #tpu.dot_dimension_numbers<[1], [0], [0], [1], [0, 0, 1, 1], [], []>} : vector<2x128xf32>, vector<128x256xf32>, vector<2x256xf32> -> vector<2x256xf32>
    %c0_12 = arith.constant 0 : index
    %c0_13 = arith.constant 0 : index
    %c0_14 = arith.constant 0 : index
    %18 = vector.load %arg6[%c0_12, %c0_13, %c0_14] : memref<1x2x256xf32, #tpu.memory_space<vmem>>, vector<1x2x256xf32>
    %19 = vector.shape_cast %18 : vector<1x2x256xf32> to vector<2x256xf32>
    %20 = vector.shape_cast %17 : vector<2x256xf32> to vector<1x2x256xf32>
    tpu.vector_store %arg6[%c0_12, %c0_13, %c0_14], %20 {strides = array<i32>} : memref<1x2x256xf32, #tpu.memory_space<vmem>>, vector<1x2x256xf32>,
    return
  }
  func.func @transform_0(%arg0: i32, %arg1: i32) -> (i32, i32, i32) {
    %c0_i32 = arith.constant 0 : i32
    %c0_i32_0 = arith.constant 0 : i32
    return %arg0, %c0_i32, %arg1 : i32, i32, i32
  }
  func.func @transform_1(%arg0: i32, %arg1: i32) -> (i32, i32) {
    %c0_i32 = arith.constant 0 : i32
    %c0_i32_0 = arith.constant 0 : i32
    %c0_i32_1 = arith.constant 0 : i32
    return %c0_i32, %c0_i32_0 : i32, i32
  }
  func.func @transform_2(%arg0: i32, %arg1: i32) -> (i32, i32) {
    %c0_i32 = arith.constant 0 : i32
    %c0_i32_0 = arith.constant 0 : i32
    %c0_i32_1 = arith.constant 0 : i32
    return %c0_i32, %c0_i32_0 : i32, i32
  }
  func.func @transform_3(%arg0: i32, %arg1: i32) -> (i32, i32, i32) {
    %c0_i32 = arith.constant 0 : i32
    %c0_i32_0 = arith.constant 0 : i32
    %c0_i32_1 = arith.constant 0 : i32
    return %arg0, %c0_i32, %c0_i32_0 : i32, i32, i32
  }
  func.func @transform_4(%arg0: i32, %arg1: i32) -> (i32, i32, i32) {
    %c0_i32 = arith.constant 0 : i32
    %c0_i32_0 = arith.constant 0 : i32
    return %arg0, %c0_i32, %arg1 : i32, i32, i32
  }
}

</mosaic_0001>

<llo_original>
// kernel: tpu_custom_call.1
$region0: #{tpu_custom_call.1}
  #allocation0 [shape = 'u32[]', space=smem, size = 0x4, offset = 0x4, fixed_abs, tag = 'smem constant byte address 0x4 - core index']
  #allocation1 [shape = 'u32[144,128]{1,0:T(1,128)}', space=vmem, size = 0x12000, scoped, tag = 'internal scratch']
  %s0 = inlined_call_operand.hbm [shape: f32[2,32,256], index: 0, kind: input, shape index: {}]
  %s1 = inlined_call_operand.hbm [shape: f32[128,32], index: 1, kind: input, shape index: {}]
  %s2 = inlined_call_operand.hbm [shape: f32[128,1], index: 2, kind: input, shape index: {}]
  %s3 = inlined_call_operand.hbm [shape: f32[2,2,128], index: 3, kind: input, shape index: {}]
  %s4 = inlined_call_operand.hbm [shape: f32[2,2,256], index: 4, kind: output, shape index: {}]
  %s5 = sld [smem:[#allocation0]]
  $region65: #{tpu_custom_call.1} parent=0
    _
  %s7 = ssub.s32 1, %s5
  %s8 = scalar_select 0, %s7, %s5
  $region1: #{tpu_custom_call.1} parent=0
    #allocation2 [shape = 'u8[65536]{0}', space=vmem, size = 0x10000, scoped, tag = 'input window, operand 0']
    #allocation3 [shape = 's32[2]{0}', space=sflag, size = 0x8, scoped, tag = 'scoped memory for tpu_custom_call.1']
    #allocation4 [shape = 's32[2]{0}', space=sflag, size = 0x8, scoped, tag = 'scoped memory for tpu_custom_call.1']
    #allocation5 [shape = 'u8[65536]{0}', space=vmem, size = 0x10000, scoped, tag = 'input window, operand 1, single buffered']
    #allocation6 [shape = 's32[1]{0}', space=sflag, size = 0x4, scoped, tag = 'scoped memory for tpu_custom_call.1']
    #allocation7 [shape = 'u8[65536]{0}', space=vmem, size = 0x10000, scoped, tag = 'input window, operand 2, single buffered']
    #allocation8 [shape = 'u8[2048]{0}', space=vmem, size = 0x800, scoped, tag = 'input window, operand 3']
    #allocation9 [shape = 's32[2]{0}', space=sflag, size = 0x8, scoped, tag = 'scoped memory for tpu_custom_call.1']
    #allocation10 [shape = 'u8[4096]{0}', space=vmem, size = 0x1000, scoped, tag = 'output window, operand 0']
    %9 = vsyncpa [#allocation3], 0
    %s10 = scalar_lea.sflag [#allocation3], 1
    %11 = vsyncpa %s10, 0
    %12 = vsyncpa [#allocation6], 0
    %13 = vsyncpa [#allocation9], 0
    %s14 = scalar_lea.sflag [#allocation9], 1
    %15 = vsyncpa %s14, 0
    %16 = vsyncpa [#allocation4], 0
    %s17 = scalar_lea.sflag [#allocation4], 1
    %18 = vsyncpa %s17, 0
    loop: start=0, step=1, limit=4
    $region2: #{tpu_custom_call.1} parent=1 // loop_pre_header
      _
    $region3: #{tpu_custom_call.1} parent=1 // loop_header
      %s20 = sphi 0, %s24
      %p21 = scmp.ge.s32.totalorder %s20, 4
      %s27 = sphi 0, %s39
      %s28 = sphi 0, %s35
      %s29 = sphi 0, %s27
      %s30 = sphi 0, %s28
      %s31 = sphi 0, %s29
      %s32 = sphi 0, %s30
      %s44 = sphi 0, %s46
      %s47 = sphi 0, %s44
      %s48 = sphi 0, %s47
      %s64 = sphi 0, %s48
      %s68 = sphi 0, %s68
      %s70 = sphi 0, %s68
      %s71 = sphi 0, %s70
      %s85 = sphi 0, %s71
      %s89 = sphi 0, %s89
      %s91 = sphi 0, %s89
      %s92 = sphi 0, %s91
      %s106 = sphi 0, %s92
      %s112 = sphi 0, %s114
      %s115 = sphi 0, %s112
      %s116 = sphi 0, %s115
      %s132 = sphi 0, %s116
      %s140 = sphi 0, %s142
      %s143 = sphi 0, %s140
      %s144 = sphi 0, %s143
      %s160 = sphi 0, %s144
    $region4: #{tpu_custom_call.1} parent=1 // loop_header_branch
      %23 = sbr.rel (%p21) target = $region8
    $region5: #{tpu_custom_call.1} parent=1 // loop_body
      %s25 = ssub.s32 %s20, 1
      %s26 = ssub.s32 %s20, 2
      %s33 = sadd.s32 1, %s28
      %p34 = scmp.ge.s32.totalorder %s33, 1
      %s35 = scalar_select %p34, 0, %s33
      %s36 = sadd.s32 1, %s27
      %s37 = scalar_select %p34, %s36, %s27
      %p38 = scmp.ge.s32.totalorder %s37, 2
      %s39 = scalar_select %p38, 0, %s37
      %s40 = ssub.s32 %s27, %s39
      %s41 = ssub.s32 %s28, %s35
      %s42 = sor.u32 %s40, %s41
      %p43 = scmp.eq.s32.totalorder %s42, 0
      %s45 = sadd.s32 %s44, 1
      %s46 = scalar_select %p43, %s44, %s45
      %p49 = pneg %p43
      %p50 = scmp.eq.s32.totalorder %s20, 1
      %p51 = por %p49, %p50
      %p52 = scmp.ne.s32.totalorder %s44, %s47
      %p53 = scmp.eq.s32.totalorder %s20, 0
      %p54 = por %p52, %p53
      %p55 = scmp.ne.s32.totalorder %s44, %s47
      %p56 = scmp.eq.s32.totalorder %s25, 1
      %p57 = por %p55, %p56
      %p58 = scmp.ne.s32.totalorder %s47, %s48
      %p59 = scmp.eq.s32.totalorder %s25, 0
      %p60 = por %p58, %p59
      %p61 = scmp.ne.s32.totalorder %s47, %s48
      %p62 = scmp.eq.s32.totalorder %s26, 1
      %p63 = por %p61, %p62
      %p65 = scmp.ne.s32.totalorder %s48, %s64
      %p66 = scmp.eq.s32.totalorder %s26, 0
      %p67 = por %p65, %p66
      %s69 = sadd.s32 %s68, 1
      %p72 = scmp.eq.s32.totalorder %s20, 1
      %p73 = scmp.ne.s32.totalorder %s68, %s70
      %p74 = scmp.eq.s32.totalorder %s20, 0
      %p75 = por %p73, %p74
      %p76 = scmp.ne.s32.totalorder %s68, %s70
      %p77 = scmp.eq.s32.totalorder %s25, 1
      %p78 = por %p76, %p77
      %p79 = scmp.ne.s32.totalorder %s70, %s71
      %p80 = scmp.eq.s32.totalorder %s25, 0
      %p81 = por %p79, %p80
      %p82 = scmp.ne.s32.totalorder %s70, %s71
      %p83 = scmp.eq.s32.totalorder %s26, 1
      %p84 = por %p82, %p83
      %p86 = scmp.ne.s32.totalorder %s71, %s85
      %p87 = scmp.eq.s32.totalorder %s26, 0
      %p88 = por %p86, %p87
      %s90 = sadd.s32 %s89, 1
      %p93 = scmp.eq.s32.totalorder %s20, 1
      %p94 = scmp.ne.s32.totalorder %s89, %s91
      %p95 = scmp.eq.s32.totalorder %s20, 0
      %p96 = por %p94, %p95
      %p97 = scmp.ne.s32.totalorder %s89, %s91
      %p98 = scmp.eq.s32.totalorder %s25, 1
      %p99 = por %p97, %p98
      %p100 = scmp.ne.s32.totalorder %s91, %s92
      %p101 = scmp.eq.s32.totalorder %s25, 0
      %p102 = por %p100, %p101
      %p103 = scmp.ne.s32.totalorder %s91, %s92
      %p104 = scmp.eq.s32.totalorder %s26, 1
      %p105 = por %p103, %p104
      %p107 = scmp.ne.s32.totalorder %s92, %s106
      %p108 = scmp.eq.s32.totalorder %s26, 0
      %p109 = por %p107, %p108
      %s110 = ssub.s32 %s27, %s39
      %p111 = scmp.eq.s32.totalorder %s110, 0
      %s113 = sadd.s32 %s112, 1
      %s114 = scalar_select %p111, %s112, %s113
      %p117 = pneg %p111
      %p118 = scmp.eq.s32.totalorder %s20, 1
      %p119 = por %p117, %p118
      %p120 = scmp.ne.s32.totalorder %s112, %s115
      %p121 = scmp.eq.s32.totalorder %s20, 0
      %p122 = por %p120, %p121
      %p123 = scmp.ne.s32.totalorder %s112, %s115
      %p124 = scmp.eq.s32.totalorder %s25, 1
      %p125 = por %p123, %p124
      %p126 = scmp.ne.s32.totalorder %s115, %s116
      %p127 = scmp.eq.s32.totalorder %s25, 0
      %p128 = por %p126, %p127
      %p129 = scmp.ne.s32.totalorder %s115, %s116
      %p130 = scmp.eq.s32.totalorder %s26, 1
      %p131 = por %p129, %p130
      %p133 = scmp.ne.s32.totalorder %s116, %s132
      %p134 = scmp.eq.s32.totalorder %s26, 0
      %p135 = por %p133, %p134
      %s136 = ssub.s32 %s27, %s39
      %s137 = ssub.s32 %s28, %s35
      %s138 = sor.u32 %s136, %s137
      %p139 = scmp.eq.s32.totalorder %s138, 0
      %s141 = sadd.s32 %s140, 1
      %s142 = scalar_select %p139, %s140, %s141
      %p145 = pneg %p139
      %p146 = scmp.eq.s32.totalorder %s20, 1
      %p147 = por %p145, %p146
      %p148 = scmp.ne.s32.totalorder %s140, %s143
      %p149 = scmp.eq.s32.totalorder %s20, 0
      %p150 = por %p148, %p149
      %p151 = scmp.ne.s32.totalorder %s140, %s143
      %p152 = scmp.eq.s32.totalorder %s25, 1
      %p153 = por %p151, %p152
      %p154 = scmp.ne.s32.totalorder %s143, %s144
      %p155 = scmp.eq.s32.totalorder %s25, 0
      %p156 = por %p154, %p155
      %p157 = scmp.ne.s32.totalorder %s143, %s144
      %p158 = scmp.eq.s32.totalorder %s26, 1
      %p159 = por %p157, %p158
      %p161 = scmp.ne.s32.totalorder %s144, %s160
      %p162 = scmp.eq.s32.totalorder %s26, 0
      %p163 = por %p161, %p162
      %p164 = scmp.le.s32.totalorder 1, %s20
      %p165 = scmp.lt.s32.totalorder %s20, 3
      %p166 = pnand %p164, %p165
      %p167 = pneg %p166
      // Predicated region
      $region9: #{tpu_custom_call.1} parent=5 // pred_check
        _
      $region10: #{tpu_custom_call.1} parent=5 // pred_check_branch
        %169 = sbr.rel (%p166) target = $region12
      $region11: #{tpu_custom_call.1} parent=5 // pred_region
        %s170 = ssub.s32 %s20, 1
        // Predicated region
        $region13: #{tpu_custom_call.1} parent=11 // pred_check
          %p171 = pneg %p81
        $region14: #{tpu_custom_call.1} parent=11 // pred_check_branch
          %173 = sbr.rel (%p171) target = $region16
        $region15: #{tpu_custom_call.1} parent=11 // pred_region
          %s175 = ssub.s32 2048, 2048
          %176 = vsyncadd [#allocation6], %s175
          %s177 = sshll.u32 [#allocation5], 4
          %s178 = int_to_ptr.vmem [resolvable:$true] %s177
          %183 = dma.hbm_to_vmem [thread:$0]  %s1, 2048, %s178, [#allocation6], 128, 128, 8
        $region16: #{tpu_custom_call.1} parent=11 // pred_fallthru
          _
        // Predicated region
        $region17: #{tpu_custom_call.1} parent=11 // pred_check
          %p184 = pneg %p102
        $region18: #{tpu_custom_call.1} parent=11 // pred_check_branch
          %186 = sbr.rel (%p184) target = $region20
        $region19: #{tpu_custom_call.1} parent=11 // pred_region
          %s188 = ssub.s32 2048, 2048
          %189 = vsyncadd [#allocation6], %s188
          %s190 = sshll.u32 [#allocation7], 4
          %s191 = int_to_ptr.vmem [resolvable:$true] %s190
          %196 = dma.hbm_to_vmem [thread:$0]  %s2, 2048, %s191, [#allocation6], 128, 128, 8
        $region20: #{tpu_custom_call.1} parent=11 // pred_fallthru
          _
      $region12: #{tpu_custom_call.1} parent=5 // pred_fallthru
        _
      %p197 = scmp.lt.s32.totalorder %s20, 2
      // Predicated region
      $region21: #{tpu_custom_call.1} parent=5 // pred_check
        %p198 = pneg %p197
      $region22: #{tpu_custom_call.1} parent=5 // pred_check_branch
        %200 = sbr.rel (%p198) target = $region24
      $region23: #{tpu_custom_call.1} parent=5 // pred_region
        // Predicated region
        $region25: #{tpu_custom_call.1} parent=23 // pred_check
          %p201 = pneg %p54
        $region26: #{tpu_custom_call.1} parent=23 // pred_check_branch
          %203 = sbr.rel (%p201) target = $region28
        $region27: #{tpu_custom_call.1} parent=23 // pred_region
          %s204 = sand.u32 %s44, 1
          %s205 = scalar_lea.sflag [#allocation3], %s204
          %s206 = sand.u32 %s44, 1
          %s207 = smul.addr %s206, 64
          %s208 = scalar_lea.vmem [#allocation2], %s207
          %s209 = smul.u32 2, %s28
          %s211 = ssub.s32 1024, 1024
          %212 = vsyncadd %s205, %s211
          %s213 = smul.addr %s27, 8
          %s214 = sadd.s32 %s209, %s213
          %s215 = smul.addr %s214, 128
          %s216 = scalar_lea.hbm %s0, %s215
          %s217 = sshll.u32 %s208, 4
          %s218 = int_to_ptr.vmem [resolvable:$true] %s217
          %223 = dma.hbm_to_vmem [thread:$0]  %s216, 1024, %s218, %s205, 256, 256, 16
        $region28: #{tpu_custom_call.1} parent=23 // pred_fallthru
          _
        // Predicated region
        $region29: #{tpu_custom_call.1} parent=23 // pred_check
          %p224 = pneg %p122
        $region30: #{tpu_custom_call.1} parent=23 // pred_check_branch
          %226 = sbr.rel (%p224) target = $region32
        $region31: #{tpu_custom_call.1} parent=23 // pred_region
          %s227 = sand.u32 %s112, 1
          %s228 = scalar_lea.sflag [#allocation9], %s227
          %s229 = sand.u32 %s112, 1
          %s230 = smul.addr %s229, 2
          %s231 = scalar_lea.vmem [#allocation8], %s230
          %s233 = ssub.s32 32, 32
          %234 = vsyncadd %s228, %s233
          %s235 = smul.addr %s27, 32
          %s236 = scalar_lea.hbm %s3, %s235
          %s238 = sshll.u32 %s231, 4
          %s239 = int_to_ptr.vmem [resolvable:$true] %s238
          %241 = dma.hbm_to_vmem [thread:$0]  %s236, 32, %s239, %s228
        $region32: #{tpu_custom_call.1} parent=23 // pred_fallthru
          _
      $region24: #{tpu_custom_call.1} parent=5 // pred_fallthru
        _
      %p242 = scmp.le.s32.totalorder 1, %s20
      %p243 = scmp.lt.s32.totalorder %s20, 3
      %p244 = pnand %p242, %p243
      %p245 = pneg %p244
      // Predicated region
      $region33: #{tpu_custom_call.1} parent=5 // pred_check
        _
      $region34: #{tpu_custom_call.1} parent=5 // pred_check_branch
        %247 = sbr.rel (%p244) target = $region36
      $region35: #{tpu_custom_call.1} parent=5 // pred_region
        %s248 = ssub.s32 %s20, 1
        %s249 = sand.u32 %s47, 1
        %s250 = scalar_lea.sflag [#allocation3], %s249
        %s251 = sand.u32 %s47, 1
        %s252 = smul.addr %s251, 64
        %s253 = scalar_lea.vmem [#allocation2], %s252
        // Predicated region
        $region37: #{tpu_custom_call.1} parent=35 // pred_check
          %p254 = pneg %p60
        $region38: #{tpu_custom_call.1} parent=35 // pred_check_branch
          %256 = sbr.rel (%p254) target = $region40
        $region39: #{tpu_custom_call.1} parent=35 // pred_region
          %257 = dma.done %s250, 1024
        $region40: #{tpu_custom_call.1} parent=35 // pred_fallthru
          _
        // Predicated region
        $region41: #{tpu_custom_call.1} parent=35 // pred_check
          %p258 = pneg %p81
        $region42: #{tpu_custom_call.1} parent=35 // pred_check_branch
          %260 = sbr.rel (%p258) target = $region44
        $region43: #{tpu_custom_call.1} parent=35 // pred_region
          %261 = dma.done [#allocation6], 2048
        $region44: #{tpu_custom_call.1} parent=35 // pred_fallthru
          _
        // Predicated region
        $region45: #{tpu_custom_call.1} parent=35 // pred_check
          %p262 = pneg %p102
        $region46: #{tpu_custom_call.1} parent=35 // pred_check_branch
          %264 = sbr.rel (%p262) target = $region48
        $region47: #{tpu_custom_call.1} parent=35 // pred_region
          %265 = dma.done [#allocation6], 2048
        $region48: #{tpu_custom_call.1} parent=35 // pred_fallthru
          _
        %s266 = sand.u32 %s115, 1
        %s267 = scalar_lea.sflag [#allocation9], %s266
        %s268 = sand.u32 %s115, 1
        %s269 = smul.addr %s268, 2
        %s270 = scalar_lea.vmem [#allocation8], %s269
        // Predicated region
        $region49: #{tpu_custom_call.1} parent=35 // pred_check
          %p271 = pneg %p128
        $region50: #{tpu_custom_call.1} parent=35 // pred_check_branch
          %273 = sbr.rel (%p271) target = $region52
        $region51: #{tpu_custom_call.1} parent=35 // pred_region
          %274 = dma.done %s267, 32
        $region52: #{tpu_custom_call.1} parent=35 // pred_fallthru
          _
        %s275 = sand.u32 %s47, 1
        %s276 = scalar_lea.sflag [#allocation3], %s275
        %s277 = sand.u32 %s47, 1
        %s278 = smul.addr %s277, 64
        %s279 = scalar_lea.vmem [#allocation2], %s278
        %p280 = pneg %p60
        %p281 = pneg %p57
        %p282 = pneg %p81
        %p283 = pneg %p78
        %p284 = pneg %p102
        %p285 = pneg %p99
        %s286 = sand.u32 %s115, 1
        %s287 = scalar_lea.sflag [#allocation9], %s286
        %s288 = sand.u32 %s115, 1
        %s289 = smul.addr %s288, 2
        %s290 = scalar_lea.vmem [#allocation8], %s289
        %p291 = pneg %p128
        %p292 = pneg %p125
        %p293 = pneg %p156
        %p294 = pneg %p153
        %s295 = sand.u32 %s143, 1
        %s296 = scalar_lea.sflag [#allocation4], %s295
        %s297 = sand.u32 %s143, 1
        %s298 = smul.addr %s297, 4
        %s299 = scalar_lea.vmem [#allocation10], %s298
        %s300 = smul.u32 2, %s30
        %s301 = smul.u32 2, %s30
        %v302 = vld [vmem:[%s253] sm:$0xff]
        %v303 = vld [vmem:[%s253 + $0x8] sm:$0xff]
        %v304 = vld [vmem:[%s253 + $0x10] sm:$0xff]
        %v305 = vld [vmem:[%s253 + $0x18] sm:$0xff]
        %v306 = vld [vmem:[%s253 + $0x20] sm:$0xff]
        %v307 = vld [vmem:[%s253 + $0x28] sm:$0xff]
        %v308 = vld [vmem:[%s253 + $0x30] sm:$0xff]
        %v309 = vld [vmem:[%s253 + $0x38] sm:$0xff]
        %v310 = vld [vmem:[#allocation5] sm:$0xff]
        %v311 = vld [vmem:[#allocation5 + $0x8] sm:$0xff]
        %v312 = vld [vmem:[#allocation5 + $0x10] sm:$0xff]
        %v313 = vld [vmem:[#allocation5 + $0x18] sm:$0xff]
        %v314 = vld [vmem:[#allocation5 + $0x20] sm:$0xff]
        %v315 = vld [vmem:[#allocation5 + $0x28] sm:$0xff]
        %v316 = vld [vmem:[#allocation5 + $0x30] sm:$0xff]
        %v317 = vld [vmem:[#allocation5 + $0x38] sm:$0xff]
        %v318 = vld [vmem:[#allocation5 + $0x40] sm:$0xff]
        %v319 = vld [vmem:[#allocation5 + $0x48] sm:$0xff]
        %v320 = vld [vmem:[#allocation5 + $0x50] sm:$0xff]
        %v321 = vld [vmem:[#allocation5 + $0x58] sm:$0xff]
        %v322 = vld [vmem:[#allocation5 + $0x60] sm:$0xff]
        %v323 = vld [vmem:[#allocation5 + $0x68] sm:$0xff]
        %v324 = vld [vmem:[#allocation5 + $0x70] sm:$0xff]
        %v325 = vld [vmem:[#allocation5 + $0x78] sm:$0xff]
        %v326 = vld [vmem:[#allocation7] sm:$0xff]
        %v327 = vld [vmem:[#allocation7 + $0x8] sm:$0xff]
        %v328 = vld [vmem:[#allocation7 + $0x10] sm:$0xff]
        %v329 = vld [vmem:[#allocation7 + $0x18] sm:$0xff]
        %v330 = vld [vmem:[#allocation7 + $0x20] sm:$0xff]
        %v331 = vld [vmem:[#allocation7 + $0x28] sm:$0xff]
        %v332 = vld [vmem:[#allocation7 + $0x30] sm:$0xff]
        %v333 = vld [vmem:[#allocation7 + $0x38] sm:$0xff]
        %v334 = vld [vmem:[#allocation7 + $0x40] sm:$0xff]
        %v335 = vld [vmem:[#allocation7 + $0x48] sm:$0xff]
        %v336 = vld [vmem:[#allocation7 + $0x50] sm:$0xff]
        %v337 = vld [vmem:[#allocation7 + $0x58] sm:$0xff]
        %v338 = vld [vmem:[#allocation7 + $0x60] sm:$0xff]
        %v339 = vld [vmem:[#allocation7 + $0x68] sm:$0xff]
        %v340 = vld [vmem:[#allocation7 + $0x70] sm:$0xff]
        %v341 = vld [vmem:[#allocation7 + $0x78] sm:$0xff]
        %343 = vset.pattern.permute.xlu0 0
        %344 = vperm.xlu0 %343, %v326
        %v345 = vpop.permute.xlu0 %344
        %348 = vset.pattern.permute.xlu0 0
        %349 = vperm.xlu0 %348, %v327
        %v350 = vpop.permute.xlu0 %349
        %353 = vset.pattern.permute.xlu0 0
        %354 = vperm.xlu0 %353, %v328
        %v355 = vpop.permute.xlu0 %354
        %358 = vset.pattern.permute.xlu0 0
        %359 = vperm.xlu0 %358, %v329
        %v360 = vpop.permute.xlu0 %359
        %363 = vset.pattern.permute.xlu0 0
        %364 = vperm.xlu0 %363, %v330
        %v365 = vpop.permute.xlu0 %364
        %368 = vset.pattern.permute.xlu0 0
        %369 = vperm.xlu0 %368, %v331
        %v370 = vpop.permute.xlu0 %369
        %373 = vset.pattern.permute.xlu0 0
        %374 = vperm.xlu0 %373, %v332
        %v375 = vpop.permute.xlu0 %374
        %378 = vset.pattern.permute.xlu0 0
        %379 = vperm.xlu0 %378, %v333
        %v380 = vpop.permute.xlu0 %379
        %383 = vset.pattern.permute.xlu0 0
        %384 = vperm.xlu0 %383, %v334
        %v385 = vpop.permute.xlu0 %384
        %388 = vset.pattern.permute.xlu0 0
        %389 = vperm.xlu0 %388, %v335
        %v390 = vpop.permute.xlu0 %389
        %393 = vset.pattern.permute.xlu0 0
        %394 = vperm.xlu0 %393, %v336
        %v395 = vpop.permute.xlu0 %394
        %398 = vset.pattern.permute.xlu0 0
        %399 = vperm.xlu0 %398, %v337
        %v400 = vpop.permute.xlu0 %399
        %403 = vset.pattern.permute.xlu0 0
        %404 = vperm.xlu0 %403, %v338
        %v405 = vpop.permute.xlu0 %404
        %408 = vset.pattern.permute.xlu0 0
        %409 = vperm.xlu0 %408, %v339
        %v410 = vpop.permute.xlu0 %409
        %413 = vset.pattern.permute.xlu0 0
        %414 = vperm.xlu0 %413, %v340
        %v415 = vpop.permute.xlu0 %414
        %418 = vset.pattern.permute.xlu0 0
        %419 = vperm.xlu0 %418, %v341
        %v420 = vpop.permute.xlu0 %419
        %vm422 = vcmask 261120
        %v424 = vsel %vm422, %v310, 0
        %v427 = vsel %vm422, %v311, 0
        %v430 = vsel %vm422, %v312, 0
        %v433 = vsel %vm422, %v313, 0
        %v436 = vsel %vm422, %v314, 0
        %v439 = vsel %vm422, %v315, 0
        %v442 = vsel %vm422, %v316, 0
        %v445 = vsel %vm422, %v317, 0
        %v448 = vsel %vm422, %v318, 0
        %v451 = vsel %vm422, %v319, 0
        %v454 = vsel %vm422, %v320, 0
        %v457 = vsel %vm422, %v321, 0
        %v460 = vsel %vm422, %v322, 0
        %v463 = vsel %vm422, %v323, 0
        %v466 = vsel %vm422, %v324, 0
        %v469 = vsel %vm422, %v325, 0
        %471 = vmatprep.subr.mxu0 %v303
        %472 = vmatpush1.msra.mxu0 %v302
        %473 = vmatprep.subr.mxu0 %v305
        %474 = vmatpush1.msra.mxu0 %v304
        %475 = vmatprep.subr.mxu0 %v307
        %476 = vmatpush1.msra.mxu0 %v306
        %477 = vmatprep.subr.mxu0 %v309
        %478 = vmatpush1.msra.mxu0 %v308
        %479 = vmatprep.subr.mxu0 0.0
        %480 = vmatpush1.msra.mxu0 0.0
        %481 = vmatprep.subr.mxu0 0.0
        %482 = vmatpush1.msra.mxu0 0.0
        %483 = vmatprep.subr.mxu0 0.0
        %484 = vmatpush1.msra.mxu0 0.0
        %485 = vmatprep.subr.mxu0 0.0
        %486 = vmatpush1.msra.mxu0 0.0
        %487 = vmatprep.subr.mxu0 0.0
        %488 = vmatpush1.msra.mxu0 0.0
        %489 = vmatprep.subr.mxu0 0.0
        %490 = vmatpush1.msra.mxu0 0.0
        %491 = vmatprep.subr.mxu0 0.0
        %492 = vmatpush1.msra.mxu0 0.0
        %493 = vmatprep.subr.mxu0 0.0
        %494 = vmatpush1.msra.mxu0 0.0
        %495 = vmatprep.subr.mxu0 0.0
        %496 = vmatpush1.msra.mxu0 0.0
        %497 = vmatprep.subr.mxu0 0.0
        %498 = vmatpush1.msra.mxu0 0.0
        %499 = vmatprep.subr.mxu0 0.0
        %500 = vmatpush1.msra.mxu0 0.0
        %501 = vmatprep.subr.mxu0 0.0
        %502 = vmatpush1.msra.mxu0 0.0
        %503 = vmatprep.subr.mxu0 0.0
        %504 = vmatpush1.msra.mxu0 0.0
        %505 = vmatprep.subr.mxu0 0.0
        %506 = vmatpush1.msra.mxu0 0.0
        %507 = vmatprep.subr.mxu0 0.0
        %508 = vmatpush1.msra.mxu0 0.0
        %509 = vmatprep.subr.mxu0 0.0
        %510 = vmatpush1.msra.mxu0 0.0
        %511 = vmatprep.subr.mxu0 0.0
        %512 = vmatpush1.msra.mxu0 0.0
        %513 = vmatprep.subr.mxu0 0.0
        %514 = vmatpush1.msra.mxu0 0.0
        %515 = vmatprep.subr.mxu0 0.0
        %516 = vmatpush1.msra.mxu0 0.0
        %517 = vmatprep.subr.mxu0 0.0
        %518 = vmatpush1.msra.mxu0 0.0
        %519 = vmatprep.subr.mxu0 0.0
        %520 = vmatpush1.msra.mxu0 0.0
        %521 = vmatprep.subr.mxu0 0.0
        %522 = vmatpush1.msra.mxu0 0.0
        %523 = vmatprep.subr.mxu0 0.0
        %524 = vmatpush1.msra.mxu0 0.0
        %525 = vmatprep.subr.mxu0 0.0
        %526 = vmatpush1.msra.mxu0 0.0
        %527 = vmatprep.subr.mxu0 0.0
        %528 = vmatpush1.msra.mxu0 0.0
        %529 = vmatprep.subr.mxu0 0.0
        %530 = vmatpush1.msra.mxu0 0.0
        %531 = vmatprep.subr.mxu0 0.0
        %532 = vmatpush1.msra.mxu0 0.0
        %533 = vmatprep.subr.mxu0 0.0
        %534 = vmatpush1.msra.mxu0 0.0
        %535 = vmatprep.mubr.f32.mxu0 0.0
        %536 = vmatmul.mubr.f32.gmra.mrb[0].mxu0 %v424
        %v537 = vpop.f32.mrb[0].mxu0
        %v538 = vadd.f32 %v345, %v537
        %v539 = vpop.f32.mrb[0].mxu0
        %v540 = vadd.f32 %v345, %v539
        %541 = vmatprep.mubr.f32.mxu0 0.0
        %542 = vmatmul.mubr.f32.gmra.mrb[0].mxu0 %v427
        %v543 = vpop.f32.mrb[0].mxu0
        %v544 = vadd.f32 %v350, %v543
        %v545 = vpop.f32.mrb[0].mxu0
        %v546 = vadd.f32 %v350, %v545
        %547 = vmatprep.mubr.f32.mxu0 0.0
        %548 = vmatmul.mubr.f32.gmra.mrb[0].mxu0 %v430
        %v549 = vpop.f32.mrb[0].mxu0
        %v550 = vadd.f32 %v355, %v549
        %v551 = vpop.f32.mrb[0].mxu0
        %v552 = vadd.f32 %v355, %v551
        %553 = vmatprep.mubr.f32.mxu0 0.0
        %554 = vmatmul.mubr.f32.gmra.mrb[0].mxu0 %v433
        %v555 = vpop.f32.mrb[0].mxu0
        %v556 = vadd.f32 %v360, %v555
        %v557 = vpop.f32.mrb[0].mxu0
        %v558 = vadd.f32 %v360, %v557
        %559 = vmatprep.mubr.f32.mxu0 0.0
        %560 = vmatmul.mubr.f32.gmra.mrb[0].mxu0 %v436
        %v561 = vpop.f32.mrb[0].mxu0
        %v562 = vadd.f32 %v365, %v561
        %v563 = vpop.f32.mrb[0].mxu0
        %v564 = vadd.f32 %v365, %v563
        %565 = vmatprep.mubr.f32.mxu0 0.0
        %566 = vmatmul.mubr.f32.gmra.mrb[0].mxu0 %v439
        %v567 = vpop.f32.mrb[0].mxu0
        %v568 = vadd.f32 %v370, %v567
        %v569 = vpop.f32.mrb[0].mxu0
        %v570 = vadd.f32 %v370, %v569
        %571 = vmatprep.mubr.f32.mxu0 0.0
        %572 = vmatmul.mubr.f32.gmra.mrb[0].mxu0 %v442
        %v573 = vpop.f32.mrb[0].mxu0
        %v574 = vadd.f32 %v375, %v573
        %v575 = vpop.f32.mrb[0].mxu0
        %v576 = vadd.f32 %v375, %v575
        %577 = vmatprep.mubr.f32.mxu0 0.0
        %578 = vmatmul.mubr.f32.gmra.mrb[0].mxu0 %v445
        %v579 = vpop.f32.mrb[0].mxu0
        %v580 = vadd.f32 %v380, %v579
        %v581 = vpop.f32.mrb[0].mxu0
        %v582 = vadd.f32 %v380, %v581
        %583 = vmatprep.mubr.f32.mxu0 0.0
        %584 = vmatmul.mubr.f32.gmra.mrb[0].mxu0 %v448
        %v585 = vpop.f32.mrb[0].mxu0
        %v586 = vadd.f32 %v385, %v585
        %v587 = vpop.f32.mrb[0].mxu0
        %v588 = vadd.f32 %v385, %v587
        %589 = vmatprep.mubr.f32.mxu0 0.0
        %590 = vmatmul.mubr.f32.gmra.mrb[0].mxu0 %v451
        %v591 = vpop.f32.mrb[0].mxu0
        %v592 = vadd.f32 %v390, %v591
        %v593 = vpop.f32.mrb[0].mxu0
        %v594 = vadd.f32 %v390, %v593
        %595 = vmatprep.mubr.f32.mxu0 0.0
        %596 = vmatmul.mubr.f32.gmra.mrb[0].mxu0 %v454
        %v597 = vpop.f32.mrb[0].mxu0
        %v598 = vadd.f32 %v395, %v597
        %v599 = vpop.f32.mrb[0].mxu0
        %v600 = vadd.f32 %v395, %v599
        %601 = vmatprep.mubr.f32.mxu0 0.0
        %602 = vmatmul.mubr.f32.gmra.mrb[0].mxu0 %v457
        %v603 = vpop.f32.mrb[0].mxu0
        %v604 = vadd.f32 %v400, %v603
        %v605 = vpop.f32.mrb[0].mxu0
        %v606 = vadd.f32 %v400, %v605
        %607 = vmatprep.mubr.f32.mxu0 0.0
        %608 = vmatmul.mubr.f32.gmra.mrb[0].mxu0 %v460
        %v609 = vpop.f32.mrb[0].mxu0
        %v610 = vadd.f32 %v405, %v609
        %v611 = vpop.f32.mrb[0].mxu0
        %v612 = vadd.f32 %v405, %v611
        %613 = vmatprep.mubr.f32.mxu0 0.0
        %614 = vmatmul.mubr.f32.gmra.mrb[0].mxu0 %v463
        %v615 = vpop.f32.mrb[0].mxu0
        %v616 = vadd.f32 %v410, %v615
        %v617 = vpop.f32.mrb[0].mxu0
        %v618 = vadd.f32 %v410, %v617
        %619 = vmatprep.mubr.f32.mxu0 0.0
        %620 = vmatmul.mubr.f32.gmra.mrb[0].mxu0 %v466
        %v621 = vpop.f32.mrb[0].mxu0
        %v622 = vadd.f32 %v415, %v621
        %v623 = vpop.f32.mrb[0].mxu0
        %v624 = vadd.f32 %v415, %v623
        %625 = vmatprep.mubr.f32.mxu0 0.0
        %626 = vmatmul.mubr.f32.gmra.mrb[0].mxu0 %v469
        %v627 = vpop.f32.mrb[0].mxu0
        %v628 = vadd.f32 %v420, %v627
        %v629 = vpop.f32.mrb[0].mxu0
        %v630 = vadd.f32 %v420, %v629
        %631 = vdwg.mxu0
        %v632 = vmul.f32 %v538, %v538
        %v633 = vmul.f32 %v540, %v540
        %v634 = vmul.f32 %v544, %v544
        %v635 = vmul.f32 %v546, %v546
        %v636 = vmul.f32 %v550, %v550
        %v637 = vmul.f32 %v552, %v552
        %v638 = vmul.f32 %v556, %v556
        %v639 = vmul.f32 %v558, %v558
        %v640 = vmul.f32 %v562, %v562
        %v641 = vmul.f32 %v564, %v564
        %v642 = vmul.f32 %v568, %v568
        %v643 = vmul.f32 %v570, %v570
        %v644 = vmul.f32 %v574, %v574
        %v645 = vmul.f32 %v576, %v576
        %v646 = vmul.f32 %v580, %v580
        %v647 = vmul.f32 %v582, %v582
        %v648 = vmul.f32 %v586, %v586
        %v649 = vmul.f32 %v588, %v588
        %v650 = vmul.f32 %v592, %v592
        %v651 = vmul.f32 %v594, %v594
        %v652 = vmul.f32 %v598, %v598
        %v653 = vmul.f32 %v600, %v600
        %v654 = vmul.f32 %v604, %v604
        %v655 = vmul.f32 %v606, %v606
        %v656 = vmul.f32 %v610, %v610
        %v657 = vmul.f32 %v612, %v612
        %v658 = vmul.f32 %v616, %v616
        %v659 = vmul.f32 %v618, %v618
        %v660 = vmul.f32 %v622, %v622
        %v661 = vmul.f32 %v624, %v624
        %v662 = vmul.f32 %v628, %v628
        %v663 = vmul.f32 %v630, %v630
        %v664 = vadd.f32 %v632, %v634
        %v665 = vadd.f32 %v664, %v636
        %v666 = vadd.f32 %v665, %v638
        %v667 = vadd.f32 %v666, %v640
        %v668 = vadd.f32 %v667, %v642
        %v669 = vadd.f32 %v668, %v644
        %v670 = vadd.f32 %v669, %v646
        %v671 = vadd.f32 %v670, %v648
        %v672 = vadd.f32 %v671, %v650
        %v673 = vadd.f32 %v672, %v652
        %v674 = vadd.f32 %v673, %v654
        %v675 = vadd.f32 %v674, %v656
        %v676 = vadd.f32 %v675, %v658
        %v677 = vadd.f32 %v676, %v660
        %v678 = vadd.f32 %v677, %v662
        %v679 = vrot.slane %v678, 4
        %v680 = vadd.f32 %v678, %v679
        %v681 = vrot.slane %v680, 2
        %v682 = vadd.f32 %v680, %v681
        %v683 = vrot.slane %v682, 1
        %v684 = vadd.f32 %v682, %v683
        %v685 = vadd.f32 %v633, %v635
        %v686 = vadd.f32 %v685, %v637
        %v687 = vadd.f32 %v686, %v639
        %v688 = vadd.f32 %v687, %v641
        %v689 = vadd.f32 %v688, %v643
        %v690 = vadd.f32 %v689, %v645
        %v691 = vadd.f32 %v690, %v647
        %v692 = vadd.f32 %v691, %v649
        %v693 = vadd.f32 %v692, %v651
        %v694 = vadd.f32 %v693, %v653
        %v695 = vadd.f32 %v694, %v655
        %v696 = vadd.f32 %v695, %v657
        %v697 = vadd.f32 %v696, %v659
        %v698 = vadd.f32 %v697, %v661
        %v699 = vadd.f32 %v698, %v663
        %v700 = vrot.slane %v699, 4
        %v701 = vadd.f32 %v699, %v700
        %v702 = vrot.slane %v701, 2
        %v703 = vadd.f32 %v701, %v702
        %v704 = vrot.slane %v703, 1
        %v705 = vadd.f32 %v703, %v704
        %v706 = vadd.f32 %v684, 1e-12
        %v707 = vadd.f32 %v705, 1e-12
        %v708 = vrsqrt.pop %v706
        %v709 = vrsqrt.pop %v707
        %v710 = vmul.f32 %v538, %v708
        %v711 = vmul.f32 %v540, %v709
        %v712 = vmul.f32 %v544, %v708
        %v713 = vmul.f32 %v546, %v709
        %v714 = vmul.f32 %v550, %v708
        %v715 = vmul.f32 %v552, %v709
        %v716 = vmul.f32 %v556, %v708
        %v717 = vmul.f32 %v558, %v709
        %v718 = vmul.f32 %v562, %v708
        %v719 = vmul.f32 %v564, %v709
        %v720 = vmul.f32 %v568, %v708
        %v721 = vmul.f32 %v570, %v709
        %v722 = vmul.f32 %v574, %v708
        %v723 = vmul.f32 %v576, %v709
        %v724 = vmul.f32 %v580, %v708
        %v725 = vmul.f32 %v582, %v709
        %v726 = vmul.f32 %v586, %v708
        %v727 = vmul.f32 %v588, %v709
        %v728 = vmul.f32 %v592, %v708
        %v729 = vmul.f32 %v594, %v709
        %v730 = vmul.f32 %v598, %v708
        %v731 = vmul.f32 %v600, %v709
        %v732 = vmul.f32 %v604, %v708
        %v733 = vmul.f32 %v606, %v709
        %v734 = vmul.f32 %v610, %v708
        %v735 = vmul.f32 %v612, %v709
        %v736 = vmul.f32 %v616, %v708
        %v737 = vmul.f32 %v618, %v709
        %v738 = vmul.f32 %v622, %v708
        %v739 = vmul.f32 %v624, %v709
        %v740 = vmul.f32 %v628, %v708
        %v741 = vmul.f32 %v630, %v709
        %v742 = vld [vmem:[%s270] sm:$0x3]
        %743 = vmatprep.subr.mxu0 %v711
        %744 = vmatpush1.msra.mxu0 %v710
        %745 = vmatprep.subr.mxu0 %v713
        %746 = vmatpush1.msra.mxu0 %v712
        %747 = vmatprep.subr.mxu0 %v715
        %748 = vmatpush1.msra.mxu0 %v714
        %749 = vmatprep.subr.mxu0 %v717
        %750 = vmatpush1.msra.mxu0 %v716
        %751 = vmatprep.subr.mxu0 %v719
        %752 = vmatpush1.msra.mxu0 %v718
        %753 = vmatprep.subr.mxu0 %v721
        %754 = vmatpush1.msra.mxu0 %v720
        %755 = vmatprep.subr.mxu0 %v723
        %756 = vmatpush1.msra.mxu0 %v722
        %757 = vmatprep.subr.mxu0 %v725
        %758 = vmatpush1.msra.mxu0 %v724
        %759 = vmatprep.subr.mxu0 %v727
        %760 = vmatpush1.msra.mxu0 %v726
        %761 = vmatprep.subr.mxu0 %v729
        %762 = vmatpush1.msra.mxu0 %v728
        %763 = vmatprep.subr.mxu0 %v731
        %764 = vmatpush1.msra.mxu0 %v730
        %765 = vmatprep.subr.mxu0 %v733
        %766 = vmatpush1.msra.mxu0 %v732
        %767 = vmatprep.subr.mxu0 %v735
        %768 = vmatpush1.msra.mxu0 %v734
        %769 = vmatprep.subr.mxu0 %v737
        %770 = vmatpush1.msra.mxu0 %v736
        %771 = vmatprep.subr.mxu0 %v739
        %772 = vmatpush1.msra.mxu0 %v738
        %773 = vmatprep.subr.mxu0 %v741
        %774 = vmatpush1.msra.mxu0 %v740
        %775 = vmatprep.subr.mxu0 0.0
        %776 = vmatpush1.msra.mxu0 0.0
        %777 = vmatprep.subr.mxu0 0.0
        %778 = vmatpush1.msra.mxu0 0.0
        %779 = vmatprep.subr.mxu0 0.0
        %780 = vmatpush1.msra.mxu0 0.0
        %781 = vmatprep.subr.mxu0 0.0
        %782 = vmatpush1.msra.mxu0 0.0
        %783 = vmatprep.subr.mxu0 0.0
        %784 = vmatpush1.msra.mxu0 0.0
        %785 = vmatprep.subr.mxu0 0.0
        %786 = vmatpush1.msra.mxu0 0.0
        %787 = vmatprep.subr.mxu0 0.0
        %788 = vmatpush1.msra.mxu0 0.0
        %789 = vmatprep.subr.mxu0 0.0
        %790 = vmatpush1.msra.mxu0 0.0
        %791 = vmatprep.subr.mxu0 0.0
        %792 = vmatpush1.msra.mxu0 0.0
        %793 = vmatprep.subr.mxu0 0.0
        %794 = vmatpush1.msra.mxu0 0.0
        %795 = vmatprep.subr.mxu0 0.0
        %796 = vmatpush1.msra.mxu0 0.0
        %797 = vmatprep.subr.mxu0 0.0
        %798 = vmatpush1.msra.mxu0 0.0
        %799 = vmatprep.subr.mxu0 0.0
        %800 = vmatpush1.msra.mxu0 0.0
        %801 = vmatprep.subr.mxu0 0.0
        %802 = vmatpush1.msra.mxu0 0.0
        %803 = vmatprep.subr.mxu0 0.0
        %804 = vmatpush1.msra.mxu0 0.0
        %805 = vmatprep.subr.mxu0 0.0
        %806 = vmatpush1.msra.mxu0 0.0
        %807 = vmatprep.mubr.f32.mxu0 0.0
        %808 = vmatmul.mubr.f32.gmra.mrb[0].mxu0 %v742
        %v809 = vpop.f32.mrb[0].mxu0
        %v810 = vadd.f32 0.0, %v809
        %v811 = vpop.f32.mrb[0].mxu0
        %v812 = vadd.f32 0.0, %v811
        %813 = vdwg.mxu0
        %v816 = vcombine.low %v810, %v812
        %v818 = vunpack.c.l.s4 1983009808
        %v819 = vunpack.c.0.s8 %v818
        %v820 = vlaneseq
        %v821 = vshrl.u32 %v820, 7
        %v822 = vsub.s32 %v819, %v821
        %v823 = vrot.slane %v816, %v822
        %825 = vst [vmem:[%s299] sm:$0xf] %v823
        %s826 = sand.u32 %s143, 1
        %s827 = scalar_lea.sflag [#allocation4], %s826
        %s828 = sand.u32 %s143, 1
        %s829 = smul.addr %s828, 4
        %s830 = scalar_lea.vmem [#allocation10], %s829
        // Predicated region
        $region53: #{tpu_custom_call.1} parent=35 // pred_check
          %p831 = pneg %p153
        $region54: #{tpu_custom_call.1} parent=35 // pred_check_branch
          %833 = sbr.rel (%p831) target = $region56
        $region55: #{tpu_custom_call.1} parent=35 // pred_region
          %s834 = smul.u32 2, %s30
          %s836 = ssub.s32 64, 64
          %837 = vsyncadd %s827, %s836
          %s838 = smul.addr %s29, 2
          %s839 = sadd.s32 %s834, %s838
          %s840 = smul.addr %s839, 32
          %s841 = scalar_lea.hbm %s4, %s840
          %s843 = sshll.u32 %s830, 4
          %s844 = int_to_ptr.vmem [resolvable:$true] %s843
          %846 = dma.vmem_to_hbm [thread:$0]  %s844, 64, %s841, %s827
        $region56: #{tpu_custom_call.1} parent=35 // pred_fallthru
          _
      $region36: #{tpu_custom_call.1} parent=5 // pred_fallthru
        _
      %p847 = scmp.le.s32.totalorder 2, %s20
      // Predicated region
      $region57: #{tpu_custom_call.1} parent=5 // pred_check
        %p848 = pneg %p847
      $region58: #{tpu_custom_call.1} parent=5 // pred_check_branch
        %850 = sbr.rel (%p848) target = $region60
      $region59: #{tpu_custom_call.1} parent=5 // pred_region
        %s851 = ssub.s32 %s20, 2
        // Predicated region
        $region61: #{tpu_custom_call.1} parent=59 // pred_check
          %p852 = pneg %p159
        $region62: #{tpu_custom_call.1} parent=59 // pred_check_branch
          %854 = sbr.rel (%p852) target = $region64
        $region63: #{tpu_custom_call.1} parent=59 // pred_region
          %s855 = sand.u32 %s144, 1
          %s856 = scalar_lea.sflag [#allocation4], %s855
          %s857 = sand.u32 %s144, 1
          %s858 = smul.addr %s857, 4
          %s859 = scalar_lea.vmem [#allocation10], %s858
          %860 = dma.done %s856, 64
        $region64: #{tpu_custom_call.1} parent=59 // pred_fallthru
          _
      $region60: #{tpu_custom_call.1} parent=5 // pred_fallthru
        _
    $region6: #{tpu_custom_call.1} parent=1 // loop_footer
      %s24 = sadd.s32 1, %s20
    $region7: #{tpu_custom_call.1} parent=1 // loop_footer_branch
      %19 = sbr.rel target = $region3
    $region8: #{tpu_custom_call.1} parent=1 // loop_exit
      _
    %861 = vsyncpa [#allocation3], 1
    %s862 = scalar_lea.sflag [#allocation3], 1
    %863 = vsyncpa %s862, 1
    %864 = vsyncpa [#allocation6], 1
    %865 = vsyncpa [#allocation9], 1
    %s866 = scalar_lea.sflag [#allocation9], 1
    %867 = vsyncpa %s866, 1
    %868 = vsyncpa [#allocation4], 1
    %s869 = scalar_lea.sflag [#allocation4], 1
    %870 = vsyncpa %s869, 1

</llo_original>
